<compile_context>
chip_gen: v6e
topology: v6e:2x2x1
jax: 0.10.0
libtpu: 0.0.40
codegen_flags: <defaults>
</compile_context>

<pallas_src>
import functools

import jax
import jax.numpy as jnp
from jax.experimental import pallas as pl
from jax.experimental.pallas import tpu as pltpu


# ----------------------------- kernels ------------------------------------- #

def _mod_ln_kernel(x_ref, w_ref, lw_ref, lb_ref, o_ref, *, eps, inv_f):
    # x_ref: (TR, Fp) row tile; w_ref: (TR, 1); lw/lb: (1, Fp) f32 (gamma/beta folded)
    x = x_ref[...].astype(jnp.float32)

    # Single-pass mean / variance over the (possibly zero-padded) feature axis.
    # Padded columns are zero, so dividing by the true F keeps the stats exact.
    s = jnp.sum(x, axis=-1, keepdims=True)
    ss = jnp.sum(x * x, axis=-1, keepdims=True)
    mean = s * inv_f
    var = jnp.maximum(ss * inv_f - mean * mean, 0.0)

    xn = (x - mean) * jax.lax.rsqrt(var + eps)
    y = xn * lw_ref[...] + lb_ref[...]
    o_ref[...] = (w_ref[...].astype(jnp.float32) * y).astype(o_ref.dtype)


def _ln_kernel(x_ref, lw_ref, lb_ref, o_ref, *, eps, inv_f):
    # Plain LayerNorm path (w is None): out = xn * lw + lb
    x = x_ref[...].astype(jnp.float32)
    s = jnp.sum(x, axis=-1, keepdims=True)
    ss = jnp.sum(x * x, axis=-1, keepdims=True)
    mean = s * inv_f
    var = jnp.maximum(ss * inv_f - mean * mean, 0.0)
    xn = (x - mean) * jax.lax.rsqrt(var + eps)
    o_ref[...] = (xn * lw_ref[...] + lb_ref[...]).astype(o_ref.dtype)


# ----------------------------- wrapper ------------------------------------- #

def _round_up(x, m):
    return ((x + m - 1) // m) * m


def _vmem_limit_bytes():
    """Scoped VMEM limit: ~half the chip's physical VMEM (capped)."""
    cap = 128 * 1024 * 1024  # v5e/v6e default if query is unavailable
    try:
        info = pltpu.get_tpu_info()
        c = getattr(info, "vmem_capacity_bytes", None)
        if c:
            cap = int(c)
    except Exception:
        pass
    # v5e/v6e (128 MiB) -> 64 MiB limit, v7x (64 MiB) -> 32 MiB limit.
    return min(cap // 2, 96 * 1024 * 1024)


def _pick_row_tile(rows, f_pad, x_itemsize, o_itemsize, vmem_limit):
    """Largest row tile such that double-buffered in/out tiles plus f32
    intermediates fit comfortably inside the scoped VMEM limit."""
    if rows <= 8:
        return rows
    budget = int(vmem_limit * 0.6)
    # Per-row bytes: 2x-buffered x tile + 2x-buffered out tile
    # + ~3 full-width f32 intermediates + the (row, 1) modulation column.
    per_row = f_pad * (2 * x_itemsize + 2 * o_itemsize + 3 * 4) + 16
    rt = max(8, (budget // per_row) // 8 * 8)
    rt = min(rt, 2048)
    if rt * 2 > rows:
        # Keep the grid length >= 2 so v7x's two TensorCores both get work.
        rt = max(8, _round_up(pl.cdiv(rows, 2), 8))
    return rt


def modulated_layer_norm(x, w, ln_weight, ln_bias, gamma, beta, *,
                         eps=1e-6, row_tile=None):
    """x: (B, S, F); w: (B, S, 1) or None; ln_weight/ln_bias: (F,);
    gamma/beta: scalar parameters (torch shape (1,1,1))."""
    B, S, F = x.shape
    rows = B * S
    x2 = x.reshape(rows, F)

    # Lane-dense feature axis: pad to a multiple of 128 if needed.
    f_pad = _round_up(F, 128)
    if f_pad != F:
        x2 = jnp.pad(x2, ((0, 0), (0, f_pad - F)))

    lw32 = ln_weight.astype(jnp.float32)
    lb32 = ln_bias.astype(jnp.float32)

    if w is None:
        lw_eff = lw32
        lb_eff = lb32
    else:
        # Fold scalar gamma/beta into the LN affine parameters (O(F) wrapper op):
        #   gamma*w*(xn*lw + lb) + beta*w == w * (xn*(gamma*lw) + (gamma*lb + beta))
        g = jnp.asarray(gamma, jnp.float32).reshape(())
        b = jnp.asarray(beta, jnp.float32).reshape(())
        lw_eff = g * lw32
        lb_eff = g * lb32 + b

    if f_pad != F:
        lw_eff = jnp.pad(lw_eff, (0, f_pad - F))
        lb_eff = jnp.pad(lb_eff, (0, f_pad - F))
    lw_eff = lw_eff.reshape(1, f_pad)
    lb_eff = lb_eff.reshape(1, f_pad)

    vmem_limit = _vmem_limit_bytes()
    if row_tile is None:
        row_tile = _pick_row_tile(rows, f_pad, x.dtype.itemsize,
                                  x.dtype.itemsize, vmem_limit)
    row_tile = min(row_tile, rows)
    grid = (pl.cdiv(rows, row_tile),)

    x_spec = pl.BlockSpec((row_tile, f_pad), lambda i: (i, 0))
    lw_spec = pl.BlockSpec((1, f_pad), lambda i: (0, 0))
    lb_spec = pl.BlockSpec((1, f_pad), lambda i: (0, 0))
    out_spec = pl.BlockSpec((row_tile, f_pad), lambda i: (i, 0))

    compiler_params = pltpu.CompilerParams(
        dimension_semantics=("parallel",),
        vmem_limit_bytes=vmem_limit,
    )

    if w is None:
        kernel = functools.partial(_ln_kernel, eps=eps, inv_f=1.0 / F)
        in_specs = [x_spec, lw_spec, lb_spec]
        args = (x2, lw_eff, lb_eff)
    else:
        kernel = functools.partial(_mod_ln_kernel, eps=eps, inv_f=1.0 / F)
        w2 = w.reshape(rows, 1)
        w_spec = pl.BlockSpec((row_tile, 1), lambda i: (i, 0))
        in_specs = [x_spec, w_spec, lw_spec, lb_spec]
        args = (x2, w2, lw_eff, lb_eff)

    out2 = pl.pallas_call(
        kernel,
        out_shape=jax.ShapeDtypeStruct((rows, f_pad), x.dtype),
        grid_spec=pltpu.PrefetchScalarGridSpec(
            num_scalar_prefetch=0,
            grid=grid,
            in_specs=in_specs,
            out_specs=out_spec,
        ),
        compiler_params=compiler_params,
    )(*args)

    if f_pad != F:
        out2 = out2[:, :F]
    return out2.reshape(B, S, F)


# ----------------------------- reference / test ---------------------------- #

def _reference(x, w, ln_weight, ln_bias, gamma, beta, eps=1e-6):
    x32 = x.astype(jnp.float32)
    mean = jnp.mean(x32, axis=-1, keepdims=True)
    var = jnp.mean((x32 - mean) ** 2, axis=-1, keepdims=True)
    y = (x32 - mean) / jnp.sqrt(var + eps) * ln_weight + ln_bias
    if w is None:
        return y
    return gamma * w * y + beta * w


if __name__ == "__main__":
    B, S, F = 2, 8, 32
    key = jax.random.PRNGKey(0)
    kx, kw, klw, klb, kg, kb = jax.random.split(key, 6)

    x = jax.random.normal(kx, (B, S, F), dtype=jnp.float32)
    w = jax.random.normal(kw, (B, S, 1), dtype=jnp.float32)

    # Deterministic synthetic parameters (shapes from the module __init__).
    ln_weight = jnp.ones((F,), jnp.float32) + 0.1 * jax.random.normal(klw, (F,))
    ln_bias = 0.1 * jax.random.normal(klb, (F,))
    gamma = jax.random.normal(kg, ())    # torch stores (1,1,1); scalar value
    beta = jax.random.normal(kb, ())

    out = modulated_layer_norm(x, w, ln_weight, ln_bias, gamma, beta)
    out = jax.block_until_ready(out)

    ref = _reference(x, w, ln_weight, ln_bias, gamma, beta)
    assert out.shape == (B, S, F)
    assert jnp.allclose(out, ref, atol=2e-5, rtol=2e-5), "mismatch vs reference"

    # Also exercise the w=None (plain LayerNorm) path.
    out_ln = jax.block_until_ready(
        modulated_layer_norm(x, None, ln_weight, ln_bias, gamma, beta))
    ref_ln = _reference(x, None, ln_weight, ln_bias, gamma, beta)
    assert jnp.allclose(out_ln, ref_ln, atol=2e-5, rtol=2e-5)

    print("KERNEL_OK")
</pallas_src>

<mosaic_0001>
module attributes {stable_mosaic.version = 11 : i64} {
  func.func @_mod_ln_kernel(%arg0: i32, %arg1: memref<8x128xf32, #tpu.memory_space<vmem>>, %arg2: memref<8x1xf32, #tpu.memory_space<vmem>>, %arg3: memref<1x128xf32, #tpu.memory_space<vmem>>, %arg4: memref<1x128xf32, #tpu.memory_space<vmem>>, %arg5: memref<8x128xf32, #tpu.memory_space<vmem>>) attributes {dimension_semantics = [#tpu.dimension_semantics<parallel>], iteration_bounds = array<i64: 2>, scalar_prefetch = 0 : i64, scratch_operands = 0 : i64, tpu.core_type = #tpu.core_type<tc>, window_params = [{transform_indices = @transform_0, window_bounds = array<i64: 8, 128>}, {transform_indices = @transform_1, window_bounds = array<i64: 8, 1>}, {pipeline_mode = #tpu.pipeline_mode<synchronous>, transform_indices = @transform_2, window_bounds = array<i64: 1, 128>}, {pipeline_mode = #tpu.pipeline_mode<synchronous>, transform_indices = @transform_3, window_bounds = array<i64: 1, 128>}, {transform_indices = @transform_4, window_bounds = array<i64: 8, 128>}]} {
    %c0 = arith.constant 0 : index
    %c0_0 = arith.constant 0 : index
    %0 = vector.load %arg1[%c0, %c0_0] : memref<8x128xf32, #tpu.memory_space<vmem>>, vector<8x128xf32>
    %cst = arith.constant dense<0.000000e+00> : vector<8xf32>
    %1 = vector.multi_reduction <add>, %0, %cst [1] : vector<8x128xf32> to vector<8xf32>
    %2 = vector.shape_cast %1 : vector<8xf32> to vector<8x1xf32>
    %3 = arith.mulf %0, %0 : vector<8x128xf32>
    %cst_1 = arith.constant dense<0.000000e+00> : vector<8xf32>
    %4 = vector.multi_reduction <add>, %3, %cst_1 [1] : vector<8x128xf32> to vector<8xf32>
    %5 = vector.shape_cast %4 : vector<8xf32> to vector<8x1xf32>
    %cst_2 = arith.constant 3.125000e-02 : f32
    %6 = vector.broadcast %cst_2 : f32 to vector<8x1xf32>
    %7 = arith.mulf %2, %6 : vector<8x1xf32>
    %cst_3 = arith.constant 3.125000e-02 : f32
    %8 = vector.broadcast %cst_3 : f32 to vector<8x1xf32>
    %9 = arith.mulf %5, %8 : vector<8x1xf32>
    %10 = arith.mulf %7, %7 : vector<8x1xf32>
    %11 = arith.subf %9, %10 : vector<8x1xf32>
    %cst_4 = arith.constant 0.000000e+00 : f32
    %12 = vector.broadcast %cst_4 : f32 to vector<8x1xf32>
    %13 = arith.maximumf %11, %12 : vector<8x1xf32>
    %14 = vector.broadcast %7 : vector<8x1xf32> to vector<8x128xf32>
    %15 = arith.subf %0, %14 : vector<8x128xf32>
    %cst_5 = arith.constant 9.99999997E-7 : f32
    %16 = vector.broadcast %cst_5 : f32 to vector<8x1xf32>
    %17 = arith.addf %13, %16 : vector<8x1xf32>
    %18 = math.rsqrt %17 : vector<8x1xf32>
    %19 = vector.broadcast %18 : vector<8x1xf32> to vector<8x128xf32>
    %20 = arith.mulf %15, %19 : vector<8x128xf32>
    %c0_6 = arith.constant 0 : index
    %c0_7 = arith.constant 0 : index
    %21 = vector.load %arg3[%c0_6, %c0_7] : memref<1x128xf32, #tpu.memory_space<vmem>>, vector<1x128xf32>
    %22 = vector.broadcast %21 : vector<1x128xf32> to vector<8x128xf32>
    %23 = arith.mulf %20, %22 : vector<8x128xf32>
    %c0_8 = arith.constant 0 : index
    %c0_9 = arith.constant 0 : index
    %24 = vector.load %arg4[%c0_8, %c0_9] : memref<1x128xf32, #tpu.memory_space<vmem>>, vector<1x128xf32>
    %25 = vector.broadcast %24 : vector<1x128xf32> to vector<8x128xf32>
    %26 = arith.addf %23, %25 : vector<8x128xf32>
    %c0_10 = arith.constant 0 : index
    %c0_11 = arith.constant 0 : index
    %27 = vector.load %arg2[%c0_10, %c0_11] : memref<8x1xf32, #tpu.memory_space<vmem>>, vector<8x1xf32>
    %28 = vector.broadcast %27 : vector<8x1xf32> to vector<8x128xf32>
    %29 = arith.mulf %28, %26 : vector<8x128xf32>
    %c0_12 = arith.constant 0 : index
    %c0_13 = arith.constant 0 : index
    %30 = vector.load %arg5[%c0_12, %c0_13] : memref<8x128xf32, #tpu.memory_space<vmem>>, vector<8x128xf32>
    tpu.vector_store %arg5[%c0_12, %c0_13], %29 {strides = array<i32>} : memref<8x128xf32, #tpu.memory_space<vmem>>, vector<8x128xf32>,
    return
  }
  func.func @transform_0(%arg0: i32) -> (i32, i32) {
    %c0_i32 = arith.constant 0 : i32
    %c0_i32_0 = arith.constant 0 : i32
    return %arg0, %c0_i32 : i32, i32
  }
  func.func @transform_1(%arg0: i32) -> (i32, i32) {
    %c0_i32 = arith.constant 0 : i32
    %c0_i32_0 = arith.constant 0 : i32
    return %arg0, %c0_i32 : i32, i32
  }
  func.func @transform_2(%arg0: i32) -> (i32, i32) {
    %c0_i32 = arith.constant 0 : i32
    %c0_i32_0 = arith.constant 0 : i32
    %c0_i32_1 = arith.constant 0 : i32
    return %c0_i32, %c0_i32_0 : i32, i32
  }
  func.func @transform_3(%arg0: i32) -> (i32, i32) {
    %c0_i32 = arith.constant 0 : i32
    %c0_i32_0 = arith.constant 0 : i32
    %c0_i32_1 = arith.constant 0 : i32
    return %c0_i32, %c0_i32_0 : i32, i32
  }
  func.func @transform_4(%arg0: i32) -> (i32, i32) {
    %c0_i32 = arith.constant 0 : i32
    %c0_i32_0 = arith.constant 0 : i32
    return %arg0, %c0_i32 : i32, i32
  }
}

</mosaic_0001>

<llo_original>
// kernel: tpu_custom_call.1
$region0: #{tpu_custom_call.1}
  #allocation0 [shape = 'u32[]', space=smem, size = 0x4, offset = 0x4, fixed_abs, tag = 'smem constant byte address 0x4 - core index']
  #allocation1 [shape = 'u32[144,128]{1,0:T(1,128)}', space=vmem, size = 0x12000, scoped, tag = 'internal scratch']
  %s0 = inlined_call_operand.vmem [shape: f32[16,128], index: 0, kind: input, shape index: {}]
  %s1 = inlined_call_operand.vmem [shape: f32[16,1], index: 1, kind: input, shape index: {}]
  %s2 = inlined_call_operand.vmem [shape: f32[1,128], index: 2, kind: input, shape index: {}]
  %s3 = inlined_call_operand.vmem [shape: f32[1,128], index: 3, kind: input, shape index: {}]
  %s4 = inlined_call_operand.hbm [shape: f32[16,128], index: 4, kind: output, shape index: {}]
  %s5 = sld [smem:[#allocation0]]
  $region49: #{tpu_custom_call.1} parent=0
    _
  %s7 = ssub.s32 1, %s5
  %s8 = scalar_select 0, %s7, %s5
  $region1: #{tpu_custom_call.1} parent=0
    #allocation2 [shape = 'u8[8192]{0}', space=vmem, size = 0x2000, scoped, tag = 'output window, operand 0']
    #allocation3 [shape = 's32[2]{0}', space=sflag, size = 0x8, scoped, tag = 'scoped memory for tpu_custom_call.1']
    %9 = vsyncpa [#allocation3], 0
    %s10 = scalar_lea.sflag [#allocation3], 1
    %11 = vsyncpa %s10, 0
    loop: start=0, step=1, limit=4
    $region2: #{tpu_custom_call.1} parent=1 // loop_pre_header
      _
    $region3: #{tpu_custom_call.1} parent=1 // loop_header
      %s13 = sphi 0, %s17
      %p14 = scmp.ge.s32.totalorder %s13, 4
      %s23 = sphi 0, %s25
      %s26 = sphi 0, %s23
      %s27 = sphi 0, %s26
      %s43 = sphi 0, %s27
      %s49 = sphi 0, %s51
      %s52 = sphi 0, %s49
      %s53 = sphi 0, %s52
      %s69 = sphi 0, %s53
      %s73 = sphi 0, %s73
      %s75 = sphi 0, %s73
      %s76 = sphi 0, %s75
      %s90 = sphi 0, %s76
      %s94 = sphi 0, %s94
      %s96 = sphi 0, %s94
      %s97 = sphi 0, %s96
      %s111 = sphi 0, %s97
      %s117 = sphi 0, %s119
      %s120 = sphi 0, %s117
      %s121 = sphi 0, %s120
      %s137 = sphi 0, %s121
    $region4: #{tpu_custom_call.1} parent=1 // loop_header_branch
      %16 = sbr.rel (%p14) target = $region8
    $region5: #{tpu_custom_call.1} parent=1 // loop_body
      %s18 = ssub.s32 %s13, 1
      %s19 = ssub.s32 %s13, 2
      %s20 = sadd.s32 %s13, 1
      %s21 = ssub.s32 %s13, %s20
      %p22 = scmp.eq.s32.totalorder %s21, 0
      %s24 = sadd.s32 %s23, 1
      %s25 = scalar_select %p22, %s23, %s24
      %p28 = pneg %p22
      %p29 = scmp.eq.s32.totalorder %s13, 1
      %p30 = por %p28, %p29
      %p31 = scmp.ne.s32.totalorder %s23, %s26
      %p32 = scmp.eq.s32.totalorder %s13, 0
      %p33 = por %p31, %p32
      %p34 = scmp.ne.s32.totalorder %s23, %s26
      %p35 = scmp.eq.s32.totalorder %s18, 1
      %p36 = por %p34, %p35
      %p37 = scmp.ne.s32.totalorder %s26, %s27
      %p38 = scmp.eq.s32.totalorder %s18, 0
      %p39 = por %p37, %p38
      %p40 = scmp.ne.s32.totalorder %s26, %s27
      %p41 = scmp.eq.s32.totalorder %s19, 1
      %p42 = por %p40, %p41
      %p44 = scmp.ne.s32.totalorder %s27, %s43
      %p45 = scmp.eq.s32.totalorder %s19, 0
      %p46 = por %p44, %p45
      %s47 = ssub.s32 %s13, %s20
      %p48 = scmp.eq.s32.totalorder %s47, 0
      %s50 = sadd.s32 %s49, 1
      %s51 = scalar_select %p48, %s49, %s50
      %p54 = pneg %p48
      %p55 = scmp.eq.s32.totalorder %s13, 1
      %p56 = por %p54, %p55
      %p57 = scmp.ne.s32.totalorder %s49, %s52
      %p58 = scmp.eq.s32.totalorder %s13, 0
      %p59 = por %p57, %p58
      %p60 = scmp.ne.s32.totalorder %s49, %s52
      %p61 = scmp.eq.s32.totalorder %s18, 1
      %p62 = por %p60, %p61
      %p63 = scmp.ne.s32.totalorder %s52, %s53
      %p64 = scmp.eq.s32.totalorder %s18, 0
      %p65 = por %p63, %p64
      %p66 = scmp.ne.s32.totalorder %s52, %s53
      %p67 = scmp.eq.s32.totalorder %s19, 1
      %p68 = por %p66, %p67
      %p70 = scmp.ne.s32.totalorder %s53, %s69
      %p71 = scmp.eq.s32.totalorder %s19, 0
      %p72 = por %p70, %p71
      %s74 = sadd.s32 %s73, 1
      %p77 = scmp.eq.s32.totalorder %s13, 1
      %p78 = scmp.ne.s32.totalorder %s73, %s75
      %p79 = scmp.eq.s32.totalorder %s13, 0
      %p80 = por %p78, %p79
      %p81 = scmp.ne.s32.totalorder %s73, %s75
      %p82 = scmp.eq.s32.totalorder %s18, 1
      %p83 = por %p81, %p82
      %p84 = scmp.ne.s32.totalorder %s75, %s76
      %p85 = scmp.eq.s32.totalorder %s18, 0
      %p86 = por %p84, %p85
      %p87 = scmp.ne.s32.totalorder %s75, %s76
      %p88 = scmp.eq.s32.totalorder %s19, 1
      %p89 = por %p87, %p88
      %p91 = scmp.ne.s32.totalorder %s76, %s90
      %p92 = scmp.eq.s32.totalorder %s19, 0
      %p93 = por %p91, %p92
      %s95 = sadd.s32 %s94, 1
      %p98 = scmp.eq.s32.totalorder %s13, 1
      %p99 = scmp.ne.s32.totalorder %s94, %s96
      %p100 = scmp.eq.s32.totalorder %s13, 0
      %p101 = por %p99, %p100
      %p102 = scmp.ne.s32.totalorder %s94, %s96
      %p103 = scmp.eq.s32.totalorder %s18, 1
      %p104 = por %p102, %p103
      %p105 = scmp.ne.s32.totalorder %s96, %s97
      %p106 = scmp.eq.s32.totalorder %s18, 0
      %p107 = por %p105, %p106
      %p108 = scmp.ne.s32.totalorder %s96, %s97
      %p109 = scmp.eq.s32.totalorder %s19, 1
      %p110 = por %p108, %p109
      %p112 = scmp.ne.s32.totalorder %s97, %s111
      %p113 = scmp.eq.s32.totalorder %s19, 0
      %p114 = por %p112, %p113
      %s115 = ssub.s32 %s13, %s20
      %p116 = scmp.eq.s32.totalorder %s115, 0
      %s118 = sadd.s32 %s117, 1
      %s119 = scalar_select %p116, %s117, %s118
      %p122 = pneg %p116
      %p123 = scmp.eq.s32.totalorder %s13, 1
      %p124 = por %p122, %p123
      %p125 = scmp.ne.s32.totalorder %s117, %s120
      %p126 = scmp.eq.s32.totalorder %s13, 0
      %p127 = por %p125, %p126
      %p128 = scmp.ne.s32.totalorder %s117, %s120
      %p129 = scmp.eq.s32.totalorder %s18, 1
      %p130 = por %p128, %p129
      %p131 = scmp.ne.s32.totalorder %s120, %s121
      %p132 = scmp.eq.s32.totalorder %s18, 0
      %p133 = por %p131, %p132
      %p134 = scmp.ne.s32.totalorder %s120, %s121
      %p135 = scmp.eq.s32.totalorder %s19, 1
      %p136 = por %p134, %p135
      %p138 = scmp.ne.s32.totalorder %s121, %s137
      %p139 = scmp.eq.s32.totalorder %s19, 0
      %p140 = por %p138, %p139
      %p141 = scmp.le.s32.totalorder 1, %s13
      %p142 = scmp.lt.s32.totalorder %s13, 3
      %p143 = pnand %p141, %p142
      %p144 = pneg %p143
      // Predicated region
      $region9: #{tpu_custom_call.1} parent=5 // pred_check
        _
      $region10: #{tpu_custom_call.1} parent=5 // pred_check_branch
        %146 = sbr.rel (%p143) target = $region12
      $region11: #{tpu_custom_call.1} parent=5 // pred_region
        %s147 = ssub.s32 %s13, 1
        // Predicated region
        $region13: #{tpu_custom_call.1} parent=11 // pred_check
          %p148 = pneg %p86
        $region14: #{tpu_custom_call.1} parent=11 // pred_check_branch
          %150 = sbr.rel (%p148) target = $region16
        $region15: #{tpu_custom_call.1} parent=11 // pred_region
          _
        $region16: #{tpu_custom_call.1} parent=11 // pred_fallthru
          _
        // Predicated region
        $region17: #{tpu_custom_call.1} parent=11 // pred_check
          %p151 = pneg %p107
        $region18: #{tpu_custom_call.1} parent=11 // pred_check_branch
          %153 = sbr.rel (%p151) target = $region20
        $region19: #{tpu_custom_call.1} parent=11 // pred_region
          _
        $region20: #{tpu_custom_call.1} parent=11 // pred_fallthru
          _
      $region12: #{tpu_custom_call.1} parent=5 // pred_fallthru
        _
      %p154 = scmp.lt.s32.totalorder %s13, 2
      // Predicated region
      $region21: #{tpu_custom_call.1} parent=5 // pred_check
        %p155 = pneg %p154
      $region22: #{tpu_custom_call.1} parent=5 // pred_check_branch
        %157 = sbr.rel (%p155) target = $region24
      $region23: #{tpu_custom_call.1} parent=5 // pred_region
        // Predicated region
        $region25: #{tpu_custom_call.1} parent=23 // pred_check
          %p158 = pneg %p33
        $region26: #{tpu_custom_call.1} parent=23 // pred_check_branch
          %160 = sbr.rel (%p158) target = $region28
        $region27: #{tpu_custom_call.1} parent=23 // pred_region
          %p161 = scmp.lt.s32.totalorder %s13, 1
          %s162 = scalar_select %p161, %s13, 1
          %s163 = smul.addr %s162, 8
          %s164 = scalar_lea.vmem %s0, %s163
        $region28: #{tpu_custom_call.1} parent=23 // pred_fallthru
          _
        // Predicated region
        $region29: #{tpu_custom_call.1} parent=23 // pred_check
          %p165 = pneg %p59
        $region30: #{tpu_custom_call.1} parent=23 // pred_check_branch
          %167 = sbr.rel (%p165) target = $region32
        $region31: #{tpu_custom_call.1} parent=23 // pred_region
          %p168 = scmp.lt.s32.totalorder %s13, 1
          %s169 = scalar_select %p168, %s13, 1
          %s170 = smul.addr %s169, 8
          %s171 = scalar_lea.vmem %s1, %s170
        $region32: #{tpu_custom_call.1} parent=23 // pred_fallthru
          _
      $region24: #{tpu_custom_call.1} parent=5 // pred_fallthru
        _
      %p172 = scmp.le.s32.totalorder 1, %s13
      %p173 = scmp.lt.s32.totalorder %s13, 3
      %p174 = pnand %p172, %p173
      %p175 = pneg %p174
      // Predicated region
      $region33: #{tpu_custom_call.1} parent=5 // pred_check
        _
      $region34: #{tpu_custom_call.1} parent=5 // pred_check_branch
        %177 = sbr.rel (%p174) target = $region36
      $region35: #{tpu_custom_call.1} parent=5 // pred_region
        %s178 = ssub.s32 %s13, 1
        %p179 = scmp.lt.s32.totalorder %s18, 1
        %s180 = scalar_select %p179, %s18, 1
        %s181 = smul.addr %s180, 8
        %s182 = scalar_lea.vmem %s0, %s181
        %p183 = pneg %p39
        %p184 = pneg %p36
        %p185 = scmp.lt.s32.totalorder %s18, 1
        %s186 = scalar_select %p185, %s18, 1
        %s187 = smul.addr %s186, 8
        %s188 = scalar_lea.vmem %s1, %s187
        %p189 = pneg %p65
        %p190 = pneg %p62
        %p191 = pneg %p86
        %p192 = pneg %p83
        %p193 = pneg %p107
        %p194 = pneg %p104
        %p195 = pneg %p133
        %p196 = pneg %p130
        %s197 = sand.u32 %s120, 1
        %s198 = scalar_lea.sflag [#allocation3], %s197
        %s199 = sand.u32 %s120, 1
        %s200 = smul.addr %s199, 8
        %s201 = scalar_lea.vmem [#allocation2], %s200
        %p202 = scmp.lt.s32.totalorder %s18, 1
        %s203 = scalar_select %p202, %s18, 1
        %s204 = smul.addr %s203, 8
        %s205 = scalar_lea.vmem %s0, %s204
        %p206 = scmp.lt.s32.totalorder %s18, 1
        %s207 = scalar_select %p206, %s18, 1
        %s208 = smul.addr %s207, 8
        %s209 = scalar_lea.vmem %s1, %s208
        %v210 = vld [vmem:[%s205] sm:$0xff]
        %211 = vadd.xlane.f32.xlu0 %v210
        %v212 = vpop.xlane.xlu0 %211
        %v213 = vmul.f32 %v210, %v210
        %214 = vadd.xlane.f32.xlu0 %v213
        %v215 = vpop.xlane.xlu0 %214
        %v216 = vmul.f32 %v212, 0.03125
        %v217 = vmul.f32 %v215, 0.03125
        %v218 = vmul.f32 %v216, %v216
        %v219 = vsub.f32 %v217, %v218
        %v220 = vmax.f32 %v219, 0.0
        %v221 = vsub.f32 %v210, %v216
        %v222 = vadd.f32 %v220, 1e-06
        %v223 = vrsqrt.pop %v222
        %v224 = vmul.f32 %v221, %v223
        %v225 = vld [vmem:[%s2] sm:$0x1]
        %v227 = vlaneseq
        %v228 = vshrl.u32 %v227, 7
        %v229 = vsub.s32 0, %v228
        %v230 = vrot.slane %v225, %v229
        %v232 = vmul.f32 %v224, %v230
        %v233 = vld [vmem:[%s3] sm:$0x1]
        %v235 = vlaneseq
        %v236 = vshrl.u32 %v235, 7
        %v237 = vsub.s32 0, %v236
        %v238 = vrot.slane %v233, %v237
        %v240 = vadd.f32 %v232, %v238
        %v241 = vld [vmem:[%s209] sm:$0xff]
        %243 = vset.pattern.permute.xlu0 0
        %244 = vperm.xlu0 %243, %v241
        %v245 = vpop.permute.xlu0 %244
        %v247 = vmul.f32 %v245, %v240
        %248 = vst [vmem:[%s201] sm:$0xff] %v247
        %s249 = sand.u32 %s120, 1
        %s250 = scalar_lea.sflag [#allocation3], %s249
        %s251 = sand.u32 %s120, 1
        %s252 = smul.addr %s251, 8
        %s253 = scalar_lea.vmem [#allocation2], %s252
        // Predicated region
        $region37: #{tpu_custom_call.1} parent=35 // pred_check
          %p254 = pneg %p130
        $region38: #{tpu_custom_call.1} parent=35 // pred_check_branch
          %256 = sbr.rel (%p254) target = $region40
        $region39: #{tpu_custom_call.1} parent=35 // pred_region
          %s258 = ssub.s32 128, 128
          %259 = vsyncadd %s250, %s258
          %s260 = smul.addr %s18, 128
          %s261 = scalar_lea.hbm %s4, %s260
          %s263 = sshll.u32 %s253, 4
          %s264 = int_to_ptr.vmem [resolvable:$true] %s263
          %266 = dma.vmem_to_hbm [thread:$0]  %s264, 128, %s261, %s250
        $region40: #{tpu_custom_call.1} parent=35 // pred_fallthru
          _
      $region36: #{tpu_custom_call.1} parent=5 // pred_fallthru
        _
      %p267 = scmp.le.s32.totalorder 2, %s13
      // Predicated region
      $region41: #{tpu_custom_call.1} parent=5 // pred_check
        %p268 = pneg %p267
      $region42: #{tpu_custom_call.1} parent=5 // pred_check_branch
        %270 = sbr.rel (%p268) target = $region44
      $region43: #{tpu_custom_call.1} parent=5 // pred_region
        %s271 = ssub.s32 %s13, 2
        // Predicated region
        $region45: #{tpu_custom_call.1} parent=43 // pred_check
          %p272 = pneg %p136
        $region46: #{tpu_custom_call.1} parent=43 // pred_check_branch
          %274 = sbr.rel (%p272) target = $region48
        $region47: #{tpu_custom_call.1} parent=43 // pred_region
          %s275 = sand.u32 %s121, 1
          %s276 = scalar_lea.sflag [#allocation3], %s275
          %s277 = sand.u32 %s121, 1
          %s278 = smul.addr %s277, 8
          %s279 = scalar_lea.vmem [#allocation2], %s278
          %280 = dma.done %s276, 128
        $region48: #{tpu_custom_call.1} parent=43 // pred_fallthru
          _
      $region44: #{tpu_custom_call.1} parent=5 // pred_fallthru
        _
    $region6: #{tpu_custom_call.1} parent=1 // loop_footer
      %s17 = sadd.s32 1, %s13
    $region7: #{tpu_custom_call.1} parent=1 // loop_footer_branch
      %12 = sbr.rel target = $region3
    $region8: #{tpu_custom_call.1} parent=1 // loop_exit
      _
    %281 = vsyncpa [#allocation3], 1
    %s282 = scalar_lea.sflag [#allocation3], 1
    %283 = vsyncpa %s282, 1

</llo_original>
